<compile_context>
chip_gen: v7x
topology: tpu7x:2x2x1
jax: 0.10.0
libtpu: 0.0.40
codegen_flags: <defaults>
</compile_context>

<pallas_src>
import functools

import jax
import jax.numpy as jnp
from jax.experimental import pallas as pl
from jax.experimental.pallas import tpu as pltpu

HIDDEN_SIZE = 32
NUM_LAYERS = 2
CLASSES = list(range(10))
NUM_CLASSES = len(CLASSES)
IN_DIM = 1 * 28 * 28           # 784 (kernel handles the non-128-multiple K)
OUT_PAD = 128                  # lane-dense output stores
LN_EPS = 1e-5
DEFAULT_TILE_B = 1024          # multiple of 8; ~6.4 MiB double-buffered x


def _round_up(n, m):
    return ((n + m - 1) // m) * m


def _layernorm(h, gamma, beta):
    # One-pass mean / variance (biased, matches PyTorch), f32, eps=1e-5.
    inv_h = 1.0 / h.shape[-1]
    s = jnp.sum(h, axis=-1, keepdims=True)
    s2 = jnp.sum(h * h, axis=-1, keepdims=True)
    mean = s * inv_h
    var = jnp.maximum(s2 * inv_h - mean * mean, 0.0)
    return (h - mean) * jax.lax.rsqrt(var + LN_EPS) * gamma + beta


def ffn_kernel(num_layers, num_classes,
               x_ref,
               w_in_ref, b_in_ref, g_in_ref, be_in_ref,
               w_h_ref, b_h_ref, g_h_ref, be_h_ref,
               w_out_ref, b_out_ref,
               o_ref):
    # ---- input projection: Linear(784 -> H) + LayerNorm + ReLU ----
    x = x_ref[...].astype(jnp.bfloat16)                       # (TILE_B, 784)
    h = jnp.dot(x, w_in_ref[...],
                preferred_element_type=jnp.float32) + b_in_ref[...]
    h = _layernorm(h, g_in_ref[...], be_in_ref[...])
    h = jnp.maximum(h, 0.0)
    # TODO(synk): nn.Dropout(p=0.5) is training-only; eval-mode identity here.

    # ---- hidden stack: num_layers x (Linear(H->H) + LayerNorm + ReLU) ----
    for i in range(num_layers):  # static unroll, all params VMEM-resident
        h = jnp.dot(h, w_h_ref[i],
                    preferred_element_type=jnp.float32) + b_h_ref[i]
        h = _layernorm(h, g_h_ref[i], be_h_ref[i])
        h = jnp.maximum(h, 0.0)
        # dropout: identity in eval mode

    # ---- output head: Linear(H -> 128-padded) + masked Softmax ----
    logits = jnp.dot(h, w_out_ref[...],
                     preferred_element_type=jnp.float32) + b_out_ref[...]
    col = jax.lax.broadcasted_iota(jnp.int32, logits.shape, 1)
    logits = jnp.where(col < num_classes, logits, -jnp.inf)   # kill pad lanes
    m = jnp.max(logits, axis=-1, keepdims=True)
    e = jnp.exp(logits - m)
    o_ref[...] = (e / jnp.sum(e, axis=-1, keepdims=True)).astype(o_ref.dtype)


def mnist_ffn_forward(x, params, tile_b=DEFAULT_TILE_B):
    """x: (B, 1, 28, 28) float32 -> (B, NUM_CLASSES) float32 softmax probs."""
    B = x.shape[0]
    x_flat = x.reshape(B, -1).astype(jnp.float32)              # torch.flatten(x, 1)

    # Pad batch to a multiple of the batch tile (zero rows are harmless and
    # sliced off at the end).  Feature dim stays at 784 — no wrapper pad pass.
    tile_b = min(tile_b, _round_up(B, 8))
    b_pad = _round_up(B, tile_b)
    if b_pad != B:
        x_flat = jnp.pad(x_flat, ((0, b_pad - B), (0, 0)))

    w_in = params["w_in"].astype(jnp.bfloat16)                 # resident, tiny
    w_out = jnp.pad(params["w_out"], ((0, 0), (0, OUT_PAD - NUM_CLASSES)))
    b_out = jnp.pad(params["b_out"], ((0, 0), (0, OUT_PAD - NUM_CLASSES)))

    grid = (b_pad // tile_b,)

    def resident(shape):
        # Full-array block, constant index -> stays in VMEM across grid steps.
        return pl.BlockSpec(shape, lambda i, _n=len(shape): (0,) * _n)

    in_specs = [
        pl.BlockSpec((tile_b, IN_DIM), lambda i: (i, 0)),                 # x
        resident((IN_DIM, HIDDEN_SIZE)),                                  # w_in
        resident((1, HIDDEN_SIZE)),                                       # b_in
        resident((1, HIDDEN_SIZE)),                                       # g_in
        resident((1, HIDDEN_SIZE)),                                       # be_in
        resident((NUM_LAYERS, HIDDEN_SIZE, HIDDEN_SIZE)),                 # w_h
        resident((NUM_LAYERS, 1, HIDDEN_SIZE)),                           # b_h
        resident((NUM_LAYERS, 1, HIDDEN_SIZE)),                           # g_h
        resident((NUM_LAYERS, 1, HIDDEN_SIZE)),                           # be_h
        resident((HIDDEN_SIZE, OUT_PAD)),                                 # w_out
        resident((1, OUT_PAD)),                                           # b_out
    ]
    out_spec = pl.BlockSpec((tile_b, OUT_PAD), lambda i: (i, 0))

    kernel = functools.partial(ffn_kernel, NUM_LAYERS, NUM_CLASSES)
    out_padded = pl.pallas_call(
        kernel,
        out_shape=jax.ShapeDtypeStruct((b_pad, OUT_PAD), jnp.float32),
        grid=grid,
        in_specs=in_specs,
        out_specs=out_spec,
        compiler_params=pltpu.CompilerParams(
            dimension_semantics=("parallel",),
            vmem_limit_bytes=32 * 1024 * 1024),
    )(
        x_flat,
        w_in, params["b_in"], params["g_in"], params["be_in"],
        params["w_h"], params["b_h"], params["g_h"], params["be_h"],
        w_out, b_out,
    )
    return out_padded[:B, :NUM_CLASSES]


def init_params(key):
    ks = jax.random.split(key, 8)
    scale = 0.05
    params = {
        # Linear weights stored pre-transposed as (in, out).
        "w_in": jax.random.normal(ks[0], (IN_DIM, HIDDEN_SIZE), jnp.float32) * scale,
        "b_in": jax.random.normal(ks[1], (1, HIDDEN_SIZE), jnp.float32) * scale,
        # LayerNorm after input projection: gamma=1, beta=0 (PyTorch init).
        "g_in": jnp.ones((1, HIDDEN_SIZE), jnp.float32),
        "be_in": jnp.zeros((1, HIDDEN_SIZE), jnp.float32),
        # Hidden stack, stacked along leading layer axis; per-layer vectors
        # kept (NUM_LAYERS, 1, H) for clean lane-wise broadcasts.
        "w_h": jax.random.normal(
            ks[2], (NUM_LAYERS, HIDDEN_SIZE, HIDDEN_SIZE), jnp.float32) * scale,
        "b_h": jax.random.normal(
            ks[3], (NUM_LAYERS, 1, HIDDEN_SIZE), jnp.float32) * scale,
        "g_h": jnp.ones((NUM_LAYERS, 1, HIDDEN_SIZE), jnp.float32),
        "be_h": jnp.zeros((NUM_LAYERS, 1, HIDDEN_SIZE), jnp.float32),
        # Output head.
        "w_out": jax.random.normal(
            ks[4], (HIDDEN_SIZE, NUM_CLASSES), jnp.float32) * scale,
        "b_out": jax.random.normal(
            ks[5], (1, NUM_CLASSES), jnp.float32) * scale,
    }
    return params


def reference_forward(x, params):
    """Pure-JAX f32 reference (eval-mode dropout) for numerical sanity."""
    B = x.shape[0]
    h = x.reshape(B, -1).astype(jnp.float32)
    h = h @ params["w_in"] + params["b_in"]

    def ln(h, g, b):
        mean = jnp.mean(h, axis=-1, keepdims=True)
        var = jnp.mean((h - mean) ** 2, axis=-1, keepdims=True)
        return (h - mean) * jax.lax.rsqrt(var + LN_EPS) * g + b

    h = jnp.maximum(ln(h, params["g_in"], params["be_in"]), 0.0)
    for i in range(NUM_LAYERS):
        h = h @ params["w_h"][i] + params["b_h"][i]
        h = jnp.maximum(ln(h, params["g_h"][i], params["be_h"][i]), 0.0)
    logits = h @ params["w_out"] + params["b_out"]
    return jax.nn.softmax(logits, axis=-1)


if __name__ == "__main__":
    key = jax.random.PRNGKey(0)
    pkey, xkey = jax.random.split(key)
    params = init_params(pkey)

    # Small batch; spatial dims fixed by the module definition (1, 28, 28).
    x = jax.random.normal(xkey, (2, 1, 28, 28), jnp.float32)

    out = mnist_ffn_forward(x, params)
    out = jax.block_until_ready(out)

    assert out.shape == (2, NUM_CLASSES)
    # Softmax rows must sum to 1.
    assert jnp.allclose(jnp.sum(out, axis=1), 1.0, atol=1e-5)
    # Matches the f32 reference within bf16-matmul tolerance.
    ref = reference_forward(x, params)
    assert jnp.allclose(out, ref, atol=2e-2), float(jnp.max(jnp.abs(out - ref)))

    print("KERNEL_OK")
</pallas_src>

<mosaic_0001>
module attributes {stable_mosaic.version = 11 : i64} {
  func.func @ffn_kernel(%arg0: i32, %arg1: memref<8x784xf32, #tpu.memory_space<vmem>>, %arg2: memref<784x32xbf16, #tpu.memory_space<vmem>>, %arg3: memref<1x32xf32, #tpu.memory_space<vmem>>, %arg4: memref<1x32xf32, #tpu.memory_space<vmem>>, %arg5: memref<1x32xf32, #tpu.memory_space<vmem>>, %arg6: memref<2x32x32xf32, #tpu.memory_space<vmem>>, %arg7: memref<2x1x32xf32, #tpu.memory_space<vmem>>, %arg8: memref<2x1x32xf32, #tpu.memory_space<vmem>>, %arg9: memref<2x1x32xf32, #tpu.memory_space<vmem>>, %arg10: memref<32x128xf32, #tpu.memory_space<vmem>>, %arg11: memref<1x128xf32, #tpu.memory_space<vmem>>, %arg12: memref<8x128xf32, #tpu.memory_space<vmem>>) attributes {dimension_semantics = [#tpu.dimension_semantics<parallel>], iteration_bounds = array<i64: 1>, scalar_prefetch = 0 : i64, scratch_operands = 0 : i64, tpu.core_type = #tpu.core_type<tc>, window_params = [{transform_indices = @transform_0, window_bounds = array<i64: 8, 784>}, {pipeline_mode = #tpu.pipeline_mode<synchronous>, transform_indices = @transform_1, window_bounds = array<i64: 784, 32>}, {pipeline_mode = #tpu.pipeline_mode<synchronous>, transform_indices = @transform_2, window_bounds = array<i64: 1, 32>}, {pipeline_mode = #tpu.pipeline_mode<synchronous>, transform_indices = @transform_3, window_bounds = array<i64: 1, 32>}, {pipeline_mode = #tpu.pipeline_mode<synchronous>, transform_indices = @transform_4, window_bounds = array<i64: 1, 32>}, {pipeline_mode = #tpu.pipeline_mode<synchronous>, transform_indices = @transform_5, window_bounds = array<i64: 2, 32, 32>}, {pipeline_mode = #tpu.pipeline_mode<synchronous>, transform_indices = @transform_6, window_bounds = array<i64: 2, 1, 32>}, {pipeline_mode = #tpu.pipeline_mode<synchronous>, transform_indices = @transform_7, window_bounds = array<i64: 2, 1, 32>}, {pipeline_mode = #tpu.pipeline_mode<synchronous>, transform_indices = @transform_8, window_bounds = array<i64: 2, 1, 32>}, {pipeline_mode = #tpu.pipeline_mode<synchronous>, transform_indices = @transform_9, window_bounds = array<i64: 32, 128>}, {pipeline_mode = #tpu.pipeline_mode<synchronous>, transform_indices = @transform_10, window_bounds = array<i64: 1, 128>}, {transform_indices = @transform_11, window_bounds = array<i64: 8, 128>}]} {
    %c0 = arith.constant 0 : index
    %c0_0 = arith.constant 0 : index
    %0 = vector.load %arg1[%c0, %c0_0] : memref<8x784xf32, #tpu.memory_space<vmem>>, vector<8x784xf32>
    %1 = arith.truncf %0 : vector<8x784xf32> to vector<8x784xbf16>
    %c0_1 = arith.constant 0 : index
    %c0_2 = arith.constant 0 : index
    %2 = vector.load %arg2[%c0_1, %c0_2] : memref<784x32xbf16, #tpu.memory_space<vmem>>, vector<784x32xbf16>
    %cst = arith.constant dense<0.000000e+00> : vector<8x32xf32>
    %3 = tpu.matmul %1, %2, %cst {dimension_numbers = #tpu.dot_dimension_numbers<[1], [0], [0], [1], [0, 0, 1, 1], [], []>} : vector<8x784xbf16>, vector<784x32xbf16>, vector<8x32xf32> -> vector<8x32xf32>
    %c0_3 = arith.constant 0 : index
    %c0_4 = arith.constant 0 : index
    %4 = vector.load %arg3[%c0_3, %c0_4] : memref<1x32xf32, #tpu.memory_space<vmem>>, vector<1x32xf32>
    %5 = vector.broadcast %4 : vector<1x32xf32> to vector<8x32xf32>
    %6 = arith.addf %3, %5 : vector<8x32xf32>
    %c0_5 = arith.constant 0 : index
    %c0_6 = arith.constant 0 : index
    %7 = vector.load %arg4[%c0_5, %c0_6] : memref<1x32xf32, #tpu.memory_space<vmem>>, vector<1x32xf32>
    %c0_7 = arith.constant 0 : index
    %c0_8 = arith.constant 0 : index
    %8 = vector.load %arg5[%c0_7, %c0_8] : memref<1x32xf32, #tpu.memory_space<vmem>>, vector<1x32xf32>
    %cst_9 = arith.constant dense<0.000000e+00> : vector<8xf32>
    %9 = vector.multi_reduction <add>, %6, %cst_9 [1] : vector<8x32xf32> to vector<8xf32>
    %10 = vector.shape_cast %9 : vector<8xf32> to vector<8x1xf32>
    %11 = arith.mulf %6, %6 : vector<8x32xf32>
    %cst_10 = arith.constant dense<0.000000e+00> : vector<8xf32>
    %12 = vector.multi_reduction <add>, %11, %cst_10 [1] : vector<8x32xf32> to vector<8xf32>
    %13 = vector.shape_cast %12 : vector<8xf32> to vector<8x1xf32>
    %cst_11 = arith.constant 3.125000e-02 : f32
    %14 = vector.broadcast %cst_11 : f32 to vector<8x1xf32>
    %15 = arith.mulf %10, %14 : vector<8x1xf32>
    %cst_12 = arith.constant 3.125000e-02 : f32
    %16 = vector.broadcast %cst_12 : f32 to vector<8x1xf32>
    %17 = arith.mulf %13, %16 : vector<8x1xf32>
    %18 = arith.mulf %15, %15 : vector<8x1xf32>
    %19 = arith.subf %17, %18 : vector<8x1xf32>
    %cst_13 = arith.constant 0.000000e+00 : f32
    %20 = vector.broadcast %cst_13 : f32 to vector<8x1xf32>
    %21 = arith.maximumf %19, %20 : vector<8x1xf32>
    %22 = vector.broadcast %15 : vector<8x1xf32> to vector<8x32xf32>
    %23 = arith.subf %6, %22 : vector<8x32xf32>
    %cst_14 = arith.constant 9.99999974E-6 : f32
    %24 = vector.broadcast %cst_14 : f32 to vector<8x1xf32>
    %25 = arith.addf %21, %24 : vector<8x1xf32>
    %26 = math.rsqrt %25 : vector<8x1xf32>
    %27 = vector.broadcast %26 : vector<8x1xf32> to vector<8x32xf32>
    %28 = arith.mulf %23, %27 : vector<8x32xf32>
    %29 = vector.broadcast %7 : vector<1x32xf32> to vector<8x32xf32>
    %30 = arith.mulf %28, %29 : vector<8x32xf32>
    %31 = vector.broadcast %8 : vector<1x32xf32> to vector<8x32xf32>
    %32 = arith.addf %30, %31 : vector<8x32xf32>
    %cst_15 = arith.constant 0.000000e+00 : f32
    %33 = vector.broadcast %cst_15 : f32 to vector<8x32xf32>
    %34 = arith.maximumf %32, %33 : vector<8x32xf32>
    %c0_16 = arith.constant 0 : index
    %c0_17 = arith.constant 0 : index
    %c0_18 = arith.constant 0 : index
    %35 = vector.load %arg6[%c0_16, %c0_17, %c0_18] : memref<2x32x32xf32, #tpu.memory_space<vmem>>, vector<1x32x32xf32>
    %36 = vector.shape_cast %35 : vector<1x32x32xf32> to vector<32x32xf32>
    %cst_19 = arith.constant dense<0.000000e+00> : vector<8x32xf32>
    %37 = tpu.matmul %34, %36, %cst_19 {dimension_numbers = #tpu.dot_dimension_numbers<[1], [0], [0], [1], [0, 0, 1, 1], [], []>} : vector<8x32xf32>, vector<32x32xf32>, vector<8x32xf32> -> vector<8x32xf32>
    %c0_20 = arith.constant 0 : index
    %c0_21 = arith.constant 0 : index
    %c0_22 = arith.constant 0 : index
    %38 = vector.load %arg7[%c0_20, %c0_21, %c0_22] : memref<2x1x32xf32, #tpu.memory_space<vmem>>, vector<1x1x32xf32>
    %39 = vector.shape_cast %38 : vector<1x1x32xf32> to vector<1x32xf32>
    %40 = vector.broadcast %39 : vector<1x32xf32> to vector<8x32xf32>
    %41 = arith.addf %37, %40 : vector<8x32xf32>
    %c0_23 = arith.constant 0 : index
    %c0_24 = arith.constant 0 : index
    %c0_25 = arith.constant 0 : index
    %42 = vector.load %arg8[%c0_23, %c0_24, %c0_25] : memref<2x1x32xf32, #tpu.memory_space<vmem>>, vector<1x1x32xf32>
    %43 = vector.shape_cast %42 : vector<1x1x32xf32> to vector<1x32xf32>
    %c0_26 = arith.constant 0 : index
    %c0_27 = arith.constant 0 : index
    %c0_28 = arith.constant 0 : index
    %44 = vector.load %arg9[%c0_26, %c0_27, %c0_28] : memref<2x1x32xf32, #tpu.memory_space<vmem>>, vector<1x1x32xf32>
    %45 = vector.shape_cast %44 : vector<1x1x32xf32> to vector<1x32xf32>
    %cst_29 = arith.constant dense<0.000000e+00> : vector<8xf32>
    %46 = vector.multi_reduction <add>, %41, %cst_29 [1] : vector<8x32xf32> to vector<8xf32>
    %47 = vector.shape_cast %46 : vector<8xf32> to vector<8x1xf32>
    %48 = arith.mulf %41, %41 : vector<8x32xf32>
    %cst_30 = arith.constant dense<0.000000e+00> : vector<8xf32>
    %49 = vector.multi_reduction <add>, %48, %cst_30 [1] : vector<8x32xf32> to vector<8xf32>
    %50 = vector.shape_cast %49 : vector<8xf32> to vector<8x1xf32>
    %cst_31 = arith.constant 3.125000e-02 : f32
    %51 = vector.broadcast %cst_31 : f32 to vector<8x1xf32>
    %52 = arith.mulf %47, %51 : vector<8x1xf32>
    %cst_32 = arith.constant 3.125000e-02 : f32
    %53 = vector.broadcast %cst_32 : f32 to vector<8x1xf32>
    %54 = arith.mulf %50, %53 : vector<8x1xf32>
    %55 = arith.mulf %52, %52 : vector<8x1xf32>
    %56 = arith.subf %54, %55 : vector<8x1xf32>
    %cst_33 = arith.constant 0.000000e+00 : f32
    %57 = vector.broadcast %cst_33 : f32 to vector<8x1xf32>
    %58 = arith.maximumf %56, %57 : vector<8x1xf32>
    %59 = vector.broadcast %52 : vector<8x1xf32> to vector<8x32xf32>
    %60 = arith.subf %41, %59 : vector<8x32xf32>
    %cst_34 = arith.constant 9.99999974E-6 : f32
    %61 = vector.broadcast %cst_34 : f32 to vector<8x1xf32>
    %62 = arith.addf %58, %61 : vector<8x1xf32>
    %63 = math.rsqrt %62 : vector<8x1xf32>
    %64 = vector.broadcast %63 : vector<8x1xf32> to vector<8x32xf32>
    %65 = arith.mulf %60, %64 : vector<8x32xf32>
    %66 = vector.broadcast %43 : vector<1x32xf32> to vector<8x32xf32>
    %67 = arith.mulf %65, %66 : vector<8x32xf32>
    %68 = vector.broadcast %45 : vector<1x32xf32> to vector<8x32xf32>
    %69 = arith.addf %67, %68 : vector<8x32xf32>
    %cst_35 = arith.constant 0.000000e+00 : f32
    %70 = vector.broadcast %cst_35 : f32 to vector<8x32xf32>
    %71 = arith.maximumf %69, %70 : vector<8x32xf32>
    %c1 = arith.constant 1 : index
    %c0_36 = arith.constant 0 : index
    %c0_37 = arith.constant 0 : index
    %72 = vector.load %arg6[%c1, %c0_36, %c0_37] : memref<2x32x32xf32, #tpu.memory_space<vmem>>, vector<1x32x32xf32>
    %73 = vector.shape_cast %72 : vector<1x32x32xf32> to vector<32x32xf32>
    %cst_38 = arith.constant dense<0.000000e+00> : vector<8x32xf32>
    %74 = tpu.matmul %71, %73, %cst_38 {dimension_numbers = #tpu.dot_dimension_numbers<[1], [0], [0], [1], [0, 0, 1, 1], [], []>} : vector<8x32xf32>, vector<32x32xf32>, vector<8x32xf32> -> vector<8x32xf32>
    %c1_39 = arith.constant 1 : index
    %c0_40 = arith.constant 0 : index
    %c0_41 = arith.constant 0 : index
    %75 = vector.load %arg7[%c1_39, %c0_40, %c0_41] : memref<2x1x32xf32, #tpu.memory_space<vmem>>, vector<1x1x32xf32>
    %76 = vector.shape_cast %75 : vector<1x1x32xf32> to vector<1x32xf32>
    %77 = vector.broadcast %76 : vector<1x32xf32> to vector<8x32xf32>
    %78 = arith.addf %74, %77 : vector<8x32xf32>
    %c1_42 = arith.constant 1 : index
    %c0_43 = arith.constant 0 : index
    %c0_44 = arith.constant 0 : index
    %79 = vector.load %arg8[%c1_42, %c0_43, %c0_44] : memref<2x1x32xf32, #tpu.memory_space<vmem>>, vector<1x1x32xf32>
    %80 = vector.shape_cast %79 : vector<1x1x32xf32> to vector<1x32xf32>
    %c1_45 = arith.constant 1 : index
    %c0_46 = arith.constant 0 : index
    %c0_47 = arith.constant 0 : index
    %81 = vector.load %arg9[%c1_45, %c0_46, %c0_47] : memref<2x1x32xf32, #tpu.memory_space<vmem>>, vector<1x1x32xf32>
    %82 = vector.shape_cast %81 : vector<1x1x32xf32> to vector<1x32xf32>
    %cst_48 = arith.constant dense<0.000000e+00> : vector<8xf32>
    %83 = vector.multi_reduction <add>, %78, %cst_48 [1] : vector<8x32xf32> to vector<8xf32>
    %84 = vector.shape_cast %83 : vector<8xf32> to vector<8x1xf32>
    %85 = arith.mulf %78, %78 : vector<8x32xf32>
    %cst_49 = arith.constant dense<0.000000e+00> : vector<8xf32>
    %86 = vector.multi_reduction <add>, %85, %cst_49 [1] : vector<8x32xf32> to vector<8xf32>
    %87 = vector.shape_cast %86 : vector<8xf32> to vector<8x1xf32>
    %cst_50 = arith.constant 3.125000e-02 : f32
    %88 = vector.broadcast %cst_50 : f32 to vector<8x1xf32>
    %89 = arith.mulf %84, %88 : vector<8x1xf32>
    %cst_51 = arith.constant 3.125000e-02 : f32
    %90 = vector.broadcast %cst_51 : f32 to vector<8x1xf32>
    %91 = arith.mulf %87, %90 : vector<8x1xf32>
    %92 = arith.mulf %89, %89 : vector<8x1xf32>
    %93 = arith.subf %91, %92 : vector<8x1xf32>
    %cst_52 = arith.constant 0.000000e+00 : f32
    %94 = vector.broadcast %cst_52 : f32 to vector<8x1xf32>
    %95 = arith.maximumf %93, %94 : vector<8x1xf32>
    %96 = vector.broadcast %89 : vector<8x1xf32> to vector<8x32xf32>
    %97 = arith.subf %78, %96 : vector<8x32xf32>
    %cst_53 = arith.constant 9.99999974E-6 : f32
    %98 = vector.broadcast %cst_53 : f32 to vector<8x1xf32>
    %99 = arith.addf %95, %98 : vector<8x1xf32>
    %100 = math.rsqrt %99 : vector<8x1xf32>
    %101 = vector.broadcast %100 : vector<8x1xf32> to vector<8x32xf32>
    %102 = arith.mulf %97, %101 : vector<8x32xf32>
    %103 = vector.broadcast %80 : vector<1x32xf32> to vector<8x32xf32>
    %104 = arith.mulf %102, %103 : vector<8x32xf32>
    %105 = vector.broadcast %82 : vector<1x32xf32> to vector<8x32xf32>
    %106 = arith.addf %104, %105 : vector<8x32xf32>
    %cst_54 = arith.constant 0.000000e+00 : f32
    %107 = vector.broadcast %cst_54 : f32 to vector<8x32xf32>
    %108 = arith.maximumf %106, %107 : vector<8x32xf32>
    %c0_55 = arith.constant 0 : index
    %c0_56 = arith.constant 0 : index
    %109 = vector.load %arg10[%c0_55, %c0_56] : memref<32x128xf32, #tpu.memory_space<vmem>>, vector<32x128xf32>
    %cst_57 = arith.constant dense<0.000000e+00> : vector<8x128xf32>
    %110 = tpu.matmul %108, %109, %cst_57 {dimension_numbers = #tpu.dot_dimension_numbers<[1], [0], [0], [1], [0, 0, 1, 1], [], []>} : vector<8x32xf32>, vector<32x128xf32>, vector<8x128xf32> -> vector<8x128xf32>
    %c0_58 = arith.constant 0 : index
    %c0_59 = arith.constant 0 : index
    %111 = vector.load %arg11[%c0_58, %c0_59] : memref<1x128xf32, #tpu.memory_space<vmem>>, vector<1x128xf32>
    %112 = vector.broadcast %111 : vector<1x128xf32> to vector<8x128xf32>
    %113 = arith.addf %110, %112 : vector<8x128xf32>
    %114 = tpu.iota {dimensions = array<i32: 1>} : vector<8x128xi32>
    %c10_i32 = arith.constant 10 : i32
    %115 = vector.broadcast %c10_i32 : i32 to vector<8x128xi32>
    %116 = arith.cmpi slt, %114, %115 : vector<8x128xi32>
    %cst_60 = arith.constant 0xFF800000 : f32
    %117 = vector.broadcast %cst_60 : f32 to vector<8x128xf32>
    %118 = arith.select %116, %113, %117 : vector<8x128xi1>, vector<8x128xf32>
    %cst_61 = arith.constant dense<0xFF800000> : vector<8xf32>
    %119 = vector.multi_reduction <maximumf>, %118, %cst_61 [1] : vector<8x128xf32> to vector<8xf32>
    %120 = vector.shape_cast %119 : vector<8xf32> to vector<8x1xf32>
    %121 = vector.broadcast %120 : vector<8x1xf32> to vector<8x128xf32>
    %122 = arith.subf %118, %121 : vector<8x128xf32>
    %123 = math.exp %122 : vector<8x128xf32>
    %cst_62 = arith.constant dense<0.000000e+00> : vector<8xf32>
    %124 = vector.multi_reduction <add>, %123, %cst_62 [1] : vector<8x128xf32> to vector<8xf32>
    %125 = vector.shape_cast %124 : vector<8xf32> to vector<8x1xf32>
    %126 = vector.broadcast %125 : vector<8x1xf32> to vector<8x128xf32>
    %127 = arith.divf %123, %126 : vector<8x128xf32>
    %c0_63 = arith.constant 0 : index
    %c0_64 = arith.constant 0 : index
    %128 = vector.load %arg12[%c0_63, %c0_64] : memref<8x128xf32, #tpu.memory_space<vmem>>, vector<8x128xf32>
    tpu.vector_store %arg12[%c0_63, %c0_64], %127 {strides = array<i32>} : memref<8x128xf32, #tpu.memory_space<vmem>>, vector<8x128xf32>,
    return
  }
  func.func @transform_0(%arg0: i32) -> (i32, i32) {
    %c0_i32 = arith.constant 0 : i32
    %c0_i32_0 = arith.constant 0 : i32
    return %arg0, %c0_i32 : i32, i32
  }
  func.func @transform_1(%arg0: i32) -> (i32, i32) {
    %c0_i32 = arith.constant 0 : i32
    %c0_i32_0 = arith.constant 0 : i32
    %c0_i32_1 = arith.constant 0 : i32
    return %c0_i32, %c0_i32_0 : i32, i32
  }
  func.func @transform_2(%arg0: i32) -> (i32, i32) {
    %c0_i32 = arith.constant 0 : i32
    %c0_i32_0 = arith.constant 0 : i32
    %c0_i32_1 = arith.constant 0 : i32
    return %c0_i32, %c0_i32_0 : i32, i32
  }
  func.func @transform_3(%arg0: i32) -> (i32, i32) {
    %c0_i32 = arith.constant 0 : i32
    %c0_i32_0 = arith.constant 0 : i32
    %c0_i32_1 = arith.constant 0 : i32
    return %c0_i32, %c0_i32_0 : i32, i32
  }
  func.func @transform_4(%arg0: i32) -> (i32, i32) {
    %c0_i32 = arith.constant 0 : i32
    %c0_i32_0 = arith.constant 0 : i32
    %c0_i32_1 = arith.constant 0 : i32
    return %c0_i32, %c0_i32_0 : i32, i32
  }
  func.func @transform_5(%arg0: i32) -> (i32, i32, i32) {
    %c0_i32 = arith.constant 0 : i32
    %c0_i32_0 = arith.constant 0 : i32
    %c0_i32_1 = arith.constant 0 : i32
    %c0_i32_2 = arith.constant 0 : i32
    return %c0_i32, %c0_i32_0, %c0_i32_1 : i32, i32, i32
  }
  func.func @transform_6(%arg0: i32) -> (i32, i32, i32) {
    %c0_i32 = arith.constant 0 : i32
    %c0_i32_0 = arith.constant 0 : i32
    %c0_i32_1 = arith.constant 0 : i32
    %c0_i32_2 = arith.constant 0 : i32
    return %c0_i32, %c0_i32_0, %c0_i32_1 : i32, i32, i32
  }
  func.func @transform_7(%arg0: i32) -> (i32, i32, i32) {
    %c0_i32 = arith.constant 0 : i32
    %c0_i32_0 = arith.constant 0 : i32
    %c0_i32_1 = arith.constant 0 : i32
    %c0_i32_2 = arith.constant 0 : i32
    return %c0_i32, %c0_i32_0, %c0_i32_1 : i32, i32, i32
  }
  func.func @transform_8(%arg0: i32) -> (i32, i32, i32) {
    %c0_i32 = arith.constant 0 : i32
    %c0_i32_0 = arith.constant 0 : i32
    %c0_i32_1 = arith.constant 0 : i32
    %c0_i32_2 = arith.constant 0 : i32
    return %c0_i32, %c0_i32_0, %c0_i32_1 : i32, i32, i32
  }
  func.func @transform_9(%arg0: i32) -> (i32, i32) {
    %c0_i32 = arith.constant 0 : i32
    %c0_i32_0 = arith.constant 0 : i32
    %c0_i32_1 = arith.constant 0 : i32
    return %c0_i32, %c0_i32_0 : i32, i32
  }
  func.func @transform_10(%arg0: i32) -> (i32, i32) {
    %c0_i32 = arith.constant 0 : i32
    %c0_i32_0 = arith.constant 0 : i32
    %c0_i32_1 = arith.constant 0 : i32
    return %c0_i32, %c0_i32_0 : i32, i32
  }
  func.func @transform_11(%arg0: i32) -> (i32, i32) {
    %c0_i32 = arith.constant 0 : i32
    %c0_i32_0 = arith.constant 0 : i32
    return %arg0, %c0_i32 : i32, i32
  }
}

</mosaic_0001>

<llo_original>
// kernel: tpu_custom_call.1
$region0: #{tpu_custom_call.1}
  #allocation0 [shape = 'u32[]', space=smem, size = 0x4, offset = 0x4, fixed_abs, tag = 'smem constant byte address 0x4 - core index']
  #allocation1 [shape = 'u32[144,128]{1,0:T(1,128)}', space=vmem, size = 0x12000, scoped, tag = 'internal scratch']
  %s0 = inlined_call_operand.vmem [shape: f32[8,784], index: 0, kind: input, shape index: {}]
  %s1 = inlined_call_operand.vmem [shape: bf16[784,32], index: 1, kind: input, shape index: {}]
  %s2 = inlined_call_operand.vmem [shape: f32[1,32], index: 2, kind: input, shape index: {}]
  %s3 = inlined_call_operand.vmem [shape: f32[1,32], index: 3, kind: input, shape index: {}]
  %s4 = inlined_call_operand.vmem [shape: f32[1,32], index: 4, kind: input, shape index: {}]
  %s5 = inlined_call_operand.vmem [shape: f32[2,32,32], index: 5, kind: input, shape index: {}]
  %s6 = inlined_call_operand.vmem [shape: f32[2,1,32], index: 6, kind: input, shape index: {}]
  %s7 = inlined_call_operand.vmem [shape: f32[2,1,32], index: 7, kind: input, shape index: {}]
  %s8 = inlined_call_operand.vmem [shape: f32[2,1,32], index: 8, kind: input, shape index: {}]
  %s9 = inlined_call_operand.vmem [shape: f32[32,128], index: 9, kind: input, shape index: {}]
  %s10 = inlined_call_operand.vmem [shape: f32[1,128], index: 10, kind: input, shape index: {}]
  %s11 = inlined_call_operand.hbm [shape: f32[8,128], index: 11, kind: output, shape index: {}]
  %s12 = sld [smem:[#allocation0]]
  $region54: #{tpu_custom_call.1} parent=0
    _
  %s14 = ssub.s32 1, %s12
  %s15 = scalar_select 0, %s14, %s12
  $region1: #{tpu_custom_call.1} parent=0
    #allocation2 [shape = 'u8[4096]{0}', space=vmem, size = 0x1000, scoped, tag = 'output window, operand 0, single buffered']
    #allocation3 [shape = 's32[1]{0}', space=sflag, size = 0x4, scoped, tag = 'scoped memory for tpu_custom_call.1']
    %16 = vsyncpa [#allocation3], 0
    // Predicated region
    $region2: #{tpu_custom_call.1} parent=1 // pred_check
      _
    $region3: #{tpu_custom_call.1} parent=1 // pred_check_branch
      %18 = sbr.rel (0) target = $region5
    $region4: #{tpu_custom_call.1} parent=1 // pred_region
      _
    $region5: #{tpu_custom_call.1} parent=1 // pred_fallthru
      _
    // Predicated region
    $region6: #{tpu_custom_call.1} parent=1 // pred_check
      _
    $region7: #{tpu_custom_call.1} parent=1 // pred_check_branch
      %20 = sbr.rel (0) target = $region9
    $region8: #{tpu_custom_call.1} parent=1 // pred_region
      _
    $region9: #{tpu_custom_call.1} parent=1 // pred_fallthru
      _
    // Predicated region
    $region10: #{tpu_custom_call.1} parent=1 // pred_check
      _
    $region11: #{tpu_custom_call.1} parent=1 // pred_check_branch
      %22 = sbr.rel (0) target = $region13
    $region12: #{tpu_custom_call.1} parent=1 // pred_region
      _
    $region13: #{tpu_custom_call.1} parent=1 // pred_fallthru
      _
    // Predicated region
    $region14: #{tpu_custom_call.1} parent=1 // pred_check
      _
    $region15: #{tpu_custom_call.1} parent=1 // pred_check_branch
      %24 = sbr.rel (0) target = $region17
    $region16: #{tpu_custom_call.1} parent=1 // pred_region
      _
    $region17: #{tpu_custom_call.1} parent=1 // pred_fallthru
      _
    // Predicated region
    $region18: #{tpu_custom_call.1} parent=1 // pred_check
      _
    $region19: #{tpu_custom_call.1} parent=1 // pred_check_branch
      %26 = sbr.rel (0) target = $region21
    $region20: #{tpu_custom_call.1} parent=1 // pred_region
      _
    $region21: #{tpu_custom_call.1} parent=1 // pred_fallthru
      _
    // Predicated region
    $region22: #{tpu_custom_call.1} parent=1 // pred_check
      _
    $region23: #{tpu_custom_call.1} parent=1 // pred_check_branch
      %28 = sbr.rel (0) target = $region25
    $region24: #{tpu_custom_call.1} parent=1 // pred_region
      _
    $region25: #{tpu_custom_call.1} parent=1 // pred_fallthru
      _
    // Predicated region
    $region26: #{tpu_custom_call.1} parent=1 // pred_check
      _
    $region27: #{tpu_custom_call.1} parent=1 // pred_check_branch
      %30 = sbr.rel (0) target = $region29
    $region28: #{tpu_custom_call.1} parent=1 // pred_region
      _
    $region29: #{tpu_custom_call.1} parent=1 // pred_fallthru
      _
    // Predicated region
    $region30: #{tpu_custom_call.1} parent=1 // pred_check
      _
    $region31: #{tpu_custom_call.1} parent=1 // pred_check_branch
      %32 = sbr.rel (0) target = $region33
    $region32: #{tpu_custom_call.1} parent=1 // pred_region
      _
    $region33: #{tpu_custom_call.1} parent=1 // pred_fallthru
      _
    // Predicated region
    $region34: #{tpu_custom_call.1} parent=1 // pred_check
      _
    $region35: #{tpu_custom_call.1} parent=1 // pred_check_branch
      %34 = sbr.rel (0) target = $region37
    $region36: #{tpu_custom_call.1} parent=1 // pred_region
      _
    $region37: #{tpu_custom_call.1} parent=1 // pred_fallthru
      _
    // Predicated region
    $region38: #{tpu_custom_call.1} parent=1 // pred_check
      _
    $region39: #{tpu_custom_call.1} parent=1 // pred_check_branch
      %36 = sbr.rel (0) target = $region41
    $region40: #{tpu_custom_call.1} parent=1 // pred_region
      _
    $region41: #{tpu_custom_call.1} parent=1 // pred_fallthru
      _
    // Predicated region
    $region42: #{tpu_custom_call.1} parent=1 // pred_check
      _
    $region43: #{tpu_custom_call.1} parent=1 // pred_check_branch
      %38 = sbr.rel (0) target = $region45
    $region44: #{tpu_custom_call.1} parent=1 // pred_region
      _
    $region45: #{tpu_custom_call.1} parent=1 // pred_fallthru
      _
    %v40 = vld [vmem:[%s0] sm:$0xff]
    %v41 = vld [vmem:[%s0 + $0x8] sm:$0xff]
    %v42 = vld [vmem:[%s0 + $0x10] sm:$0xff]
    %v43 = vld [vmem:[%s0 + $0x18] sm:$0xff]
    %v44 = vld [vmem:[%s0 + $0x20] sm:$0xff]
    %v45 = vld [vmem:[%s0 + $0x28] sm:$0xff]
    %v46 = vld [vmem:[%s0 + $0x30] sm:$0xff]
    %v47 = vpack.c.bf16 %v40, %v40
    %v48 = vpack.c.bf16 %v41, %v41
    %v49 = vpack.c.bf16 %v42, %v42
    %v50 = vpack.c.bf16 %v43, %v43
    %v51 = vpack.c.bf16 %v44, %v44
    %v52 = vpack.c.bf16 %v45, %v45
    %v53 = vpack.c.bf16 %v46, %v46
    %v54 = vld [vmem:[%s1] sm:$0xf]
    %v55 = vld [vmem:[%s1 + $0x4] sm:$0xf]
    %v56 = vld [vmem:[%s1 + $0x8] sm:$0xf]
    %v57 = vld [vmem:[%s1 + $0xc] sm:$0xf]
    %v58 = vld [vmem:[%s1 + $0x10] sm:$0xf]
    %v59 = vld [vmem:[%s1 + $0x14] sm:$0xf]
    %v60 = vld [vmem:[%s1 + $0x18] sm:$0xf]
    %v61 = vld [vmem:[%s1 + $0x1c] sm:$0xf]
    %v62 = vld [vmem:[%s1 + $0x20] sm:$0xf]
    %v63 = vld [vmem:[%s1 + $0x24] sm:$0xf]
    %v64 = vld [vmem:[%s1 + $0x28] sm:$0xf]
    %v65 = vld [vmem:[%s1 + $0x2c] sm:$0xf]
    %v66 = vld [vmem:[%s1 + $0x30] sm:$0xf]
    %v67 = vld [vmem:[%s1 + $0x34] sm:$0xf]
    %v68 = vld [vmem:[%s1 + $0x38] sm:$0xf]
    %v69 = vld [vmem:[%s1 + $0x3c] sm:$0xf]
    %v70 = vld [vmem:[%s1 + $0x40] sm:$0xf]
    %v71 = vld [vmem:[%s1 + $0x44] sm:$0xf]
    %v72 = vld [vmem:[%s1 + $0x48] sm:$0xf]
    %v73 = vld [vmem:[%s1 + $0x4c] sm:$0xf]
    %v74 = vld [vmem:[%s1 + $0x50] sm:$0xf]
    %v75 = vld [vmem:[%s1 + $0x54] sm:$0xf]
    %v76 = vld [vmem:[%s1 + $0x58] sm:$0xf]
    %v77 = vld [vmem:[%s1 + $0x5c] sm:$0xf]
    %v78 = vld [vmem:[%s1 + $0x60] sm:$0xf]
    %v79 = vld [vmem:[%s1 + $0x64] sm:$0xf]
    %v80 = vld [vmem:[%s1 + $0x68] sm:$0xf]
    %v81 = vld [vmem:[%s1 + $0x6c] sm:$0xf]
    %v82 = vld [vmem:[%s1 + $0x70] sm:$0xf]
    %v83 = vld [vmem:[%s1 + $0x74] sm:$0xf]
    %v84 = vld [vmem:[%s1 + $0x78] sm:$0xf]
    %v85 = vld [vmem:[%s1 + $0x7c] sm:$0xf]
    %v86 = vld [vmem:[%s1 + $0x80] sm:$0xf]
    %v87 = vld [vmem:[%s1 + $0x84] sm:$0xf]
    %v88 = vld [vmem:[%s1 + $0x88] sm:$0xf]
    %v89 = vld [vmem:[%s1 + $0x8c] sm:$0xf]
    %v90 = vld [vmem:[%s1 + $0x90] sm:$0xf]
    %v91 = vld [vmem:[%s1 + $0x94] sm:$0xf]
    %v92 = vld [vmem:[%s1 + $0x98] sm:$0xf]
    %v93 = vld [vmem:[%s1 + $0x9c] sm:$0xf]
    %v94 = vld [vmem:[%s1 + $0xa0] sm:$0xf]
    %v95 = vld [vmem:[%s1 + $0xa4] sm:$0xf]
    %v96 = vld [vmem:[%s1 + $0xa8] sm:$0xf]
    %v97 = vld [vmem:[%s1 + $0xac] sm:$0xf]
    %v98 = vld [vmem:[%s1 + $0xb0] sm:$0xf]
    %v99 = vld [vmem:[%s1 + $0xb4] sm:$0xf]
    %v100 = vld [vmem:[%s1 + $0xb8] sm:$0xf]
    %v101 = vld [vmem:[%s1 + $0xbc] sm:$0xf]
    %v102 = vld [vmem:[%s1 + $0xc0] sm:$0xf]
    %v103 = vld [vmem:[%s1 + $0xc4] sm:$0xf]
    %v104 = vld [vmem:[%s1 + $0xc8] sm:$0xf]
    %v105 = vld [vmem:[%s1 + $0xcc] sm:$0xf]
    %v106 = vld [vmem:[%s1 + $0xd0] sm:$0xf]
    %v107 = vld [vmem:[%s1 + $0xd4] sm:$0xf]
    %v108 = vld [vmem:[%s1 + $0xd8] sm:$0xf]
    %v109 = vld [vmem:[%s1 + $0xdc] sm:$0xf]
    %v110 = vld [vmem:[%s1 + $0xe0] sm:$0xf]
    %v111 = vld [vmem:[%s1 + $0xe4] sm:$0xf]
    %v112 = vld [vmem:[%s1 + $0xe8] sm:$0xf]
    %v113 = vld [vmem:[%s1 + $0xec] sm:$0xf]
    %v114 = vld [vmem:[%s1 + $0xf0] sm:$0xf]
    %v115 = vld [vmem:[%s1 + $0xf4] sm:$0xf]
    %v116 = vld [vmem:[%s1 + $0xf8] sm:$0xf]
    %v117 = vld [vmem:[%s1 + $0xfc] sm:$0xf]
    %v118 = vld [vmem:[%s1 + $0x100] sm:$0xf]
    %v119 = vld [vmem:[%s1 + $0x104] sm:$0xf]
    %v120 = vld [vmem:[%s1 + $0x108] sm:$0xf]
    %v121 = vld [vmem:[%s1 + $0x10c] sm:$0xf]
    %v122 = vld [vmem:[%s1 + $0x110] sm:$0xf]
    %v123 = vld [vmem:[%s1 + $0x114] sm:$0xf]
    %v124 = vld [vmem:[%s1 + $0x118] sm:$0xf]
    %v125 = vld [vmem:[%s1 + $0x11c] sm:$0xf]
    %v126 = vld [vmem:[%s1 + $0x120] sm:$0xf]
    %v127 = vld [vmem:[%s1 + $0x124] sm:$0xf]
    %v128 = vld [vmem:[%s1 + $0x128] sm:$0xf]
    %v129 = vld [vmem:[%s1 + $0x12c] sm:$0xf]
    %v130 = vld [vmem:[%s1 + $0x130] sm:$0xf]
    %v131 = vld [vmem:[%s1 + $0x134] sm:$0xf]
    %v132 = vld [vmem:[%s1 + $0x138] sm:$0xf]
    %v133 = vld [vmem:[%s1 + $0x13c] sm:$0xf]
    %v134 = vld [vmem:[%s1 + $0x140] sm:$0xf]
    %v135 = vld [vmem:[%s1 + $0x144] sm:$0xf]
    %v136 = vld [vmem:[%s1 + $0x148] sm:$0xf]
    %v137 = vld [vmem:[%s1 + $0x14c] sm:$0xf]
    %v138 = vld [vmem:[%s1 + $0x150] sm:$0xf]
    %v139 = vld [vmem:[%s1 + $0x154] sm:$0xf]
    %v140 = vld [vmem:[%s1 + $0x158] sm:$0xf]
    %v141 = vld [vmem:[%s1 + $0x15c] sm:$0xf]
    %v142 = vld [vmem:[%s1 + $0x160] sm:$0xf]
    %v143 = vld [vmem:[%s1 + $0x164] sm:$0xf]
    %v144 = vld [vmem:[%s1 + $0x168] sm:$0xf]
    %v145 = vld [vmem:[%s1 + $0x16c] sm:$0xf]
    %v146 = vld [vmem:[%s1 + $0x170] sm:$0xf]
    %v147 = vld [vmem:[%s1 + $0x174] sm:$0xf]
    %v148 = vld [vmem:[%s1 + $0x178] sm:$0xf]
    %v149 = vld [vmem:[%s1 + $0x17c] sm:$0xf]
    %v150 = vld [vmem:[%s1 + $0x180] sm:$0xf]
    %v151 = vld [vmem:[%s1 + $0x184] sm:$0xf]
    %v152 = vld [vmem:[%s2] sm:$0x1]
    %v154 = vlaneseq
    %v155 = vshrl.u32 %v154, 7
    %v156 = vsub.s32 0, %v155
    %v157 = vrot.slane %v152, %v156
    %v257 = vunpack.c.l.b16 %v54
    %v258 = vunpack.c.l.b16 %v55
    %v259 = vunpack.c.l.b16 %v56
    %v260 = vunpack.c.l.b16 %v57
    %v261 = vunpack.c.l.b16 %v58
    %v262 = vunpack.c.l.b16 %v59
    %v263 = vunpack.c.l.b16 %v60
    %v264 = vunpack.c.l.b16 %v61
    %v265 = vunpack.c.l.b16 %v62
    %v266 = vunpack.c.l.b16 %v63
    %v267 = vunpack.c.l.b16 %v64
    %v268 = vunpack.c.l.b16 %v65
    %v269 = vunpack.c.l.b16 %v66
    %v270 = vunpack.c.l.b16 %v67
    %v271 = vunpack.c.l.b16 %v68
    %v272 = vunpack.c.l.b16 %v69
    %v273 = vunpack.c.l.b16 %v70
    %v274 = vunpack.c.l.b16 %v71
    %v275 = vunpack.c.l.b16 %v72
    %v276 = vunpack.c.l.b16 %v73
    %v277 = vunpack.c.l.b16 %v74
    %v278 = vunpack.c.l.b16 %v75
    %v279 = vunpack.c.l.b16 %v76
    %v280 = vunpack.c.l.b16 %v77
    %v281 = vunpack.c.l.b16 %v78
    %v282 = vunpack.c.l.b16 %v79
    %v283 = vunpack.c.l.b16 %v80
    %v284 = vunpack.c.l.b16 %v81
    %v285 = vunpack.c.l.b16 %v82
    %v286 = vunpack.c.l.b16 %v83
    %v287 = vunpack.c.l.b16 %v84
    %v288 = vunpack.c.l.b16 %v85
    %v289 = vunpack.c.l.b16 %v86
    %v290 = vunpack.c.l.b16 %v87
    %v291 = vunpack.c.l.b16 %v88
    %v292 = vunpack.c.l.b16 %v89
    %v293 = vunpack.c.l.b16 %v90
    %v294 = vunpack.c.l.b16 %v91
    %v295 = vunpack.c.l.b16 %v92
    %v296 = vunpack.c.l.b16 %v93
    %v297 = vunpack.c.l.b16 %v94
    %v298 = vunpack.c.l.b16 %v95
    %v299 = vunpack.c.l.b16 %v96
    %v300 = vunpack.c.l.b16 %v97
    %v301 = vunpack.c.l.b16 %v98
    %v302 = vunpack.c.l.b16 %v99
    %v303 = vunpack.c.l.b16 %v100
    %v304 = vunpack.c.l.b16 %v101
    %v305 = vunpack.c.l.b16 %v102
    %v306 = vunpack.c.l.b16 %v103
    %v307 = vunpack.c.l.b16 %v104
    %v308 = vunpack.c.l.b16 %v105
    %v309 = vunpack.c.l.b16 %v106
    %v310 = vunpack.c.l.b16 %v107
    %v311 = vunpack.c.l.b16 %v108
    %v312 = vunpack.c.l.b16 %v109
    %v313 = vunpack.c.l.b16 %v110
    %v314 = vunpack.c.l.b16 %v111
    %v315 = vunpack.c.l.b16 %v112
    %v316 = vunpack.c.l.b16 %v113
    %v317 = vunpack.c.l.b16 %v114
    %v318 = vunpack.c.l.b16 %v115
    %v319 = vunpack.c.l.b16 %v116
    %v320 = vunpack.c.l.b16 %v117
    %v321 = vunpack.c.l.b16 %v118
    %v322 = vunpack.c.l.b16 %v119
    %v323 = vunpack.c.l.b16 %v120
    %v324 = vunpack.c.l.b16 %v121
    %v325 = vunpack.c.l.b16 %v122
    %v326 = vunpack.c.l.b16 %v123
    %v327 = vunpack.c.l.b16 %v124
    %v328 = vunpack.c.l.b16 %v125
    %v329 = vunpack.c.l.b16 %v126
    %v330 = vunpack.c.l.b16 %v127
    %v331 = vunpack.c.l.b16 %v128
    %v332 = vunpack.c.l.b16 %v129
    %v333 = vunpack.c.l.b16 %v130
    %v334 = vunpack.c.l.b16 %v131
    %v335 = vunpack.c.l.b16 %v132
    %v336 = vunpack.c.l.b16 %v133
    %v337 = vunpack.c.l.b16 %v134
    %v338 = vunpack.c.l.b16 %v135
    %v339 = vunpack.c.l.b16 %v136
    %v340 = vunpack.c.l.b16 %v137
    %v341 = vunpack.c.l.b16 %v138
    %v342 = vunpack.c.l.b16 %v139
    %v343 = vunpack.c.l.b16 %v140
    %v344 = vunpack.c.l.b16 %v141
    %v345 = vunpack.c.l.b16 %v142
    %v346 = vunpack.c.l.b16 %v143
    %v347 = vunpack.c.l.b16 %v144
    %v348 = vunpack.c.l.b16 %v145
    %v349 = vunpack.c.l.b16 %v146
    %v350 = vunpack.c.l.b16 %v147
    %v351 = vunpack.c.l.b16 %v148
    %v352 = vunpack.c.l.b16 %v149
    %v353 = vunpack.c.l.b16 %v150
    %v354 = vunpack.c.l.b16 %v151
    %v355 = vpack.c.b16 %v258, %v257
    %v356 = vpack.c.b16 %v260, %v259
    %v357 = vpack.c.b16 %v262, %v261
    %v358 = vpack.c.b16 %v264, %v263
    %v359 = vpack.c.b16 %v266, %v265
    %v360 = vpack.c.b16 %v268, %v267
    %v361 = vpack.c.b16 %v270, %v269
    %v362 = vpack.c.b16 %v272, %v271
    %v363 = vpack.c.b16 %v274, %v273
    %v364 = vpack.c.b16 %v276, %v275
    %v365 = vpack.c.b16 %v278, %v277
    %v366 = vpack.c.b16 %v280, %v279
    %v367 = vpack.c.b16 %v282, %v281
    %v368 = vpack.c.b16 %v284, %v283
    %v369 = vpack.c.b16 %v286, %v285
    %v370 = vpack.c.b16 %v288, %v287
    %v371 = vpack.c.b16 %v290, %v289
    %v372 = vpack.c.b16 %v292, %v291
    %v373 = vpack.c.b16 %v294, %v293
    %v374 = vpack.c.b16 %v296, %v295
    %v375 = vpack.c.b16 %v298, %v297
    %v376 = vpack.c.b16 %v300, %v299
    %v377 = vpack.c.b16 %v302, %v301
    %v378 = vpack.c.b16 %v304, %v303
    %v379 = vpack.c.b16 %v306, %v305
    %v380 = vpack.c.b16 %v308, %v307
    %v381 = vpack.c.b16 %v310, %v309
    %v382 = vpack.c.b16 %v312, %v311
    %v383 = vpack.c.b16 %v314, %v313
    %v384 = vpack.c.b16 %v316, %v315
    %v385 = vpack.c.b16 %v318, %v317
    %v386 = vpack.c.b16 %v320, %v319
    %v387 = vpack.c.b16 %v322, %v321
    %v388 = vpack.c.b16 %v324, %v323
    %v389 = vpack.c.b16 %v326, %v325
    %v390 = vpack.c.b16 %v328, %v327
    %v391 = vpack.c.b16 %v330, %v329
    %v392 = vpack.c.b16 %v332, %v331
    %v393 = vpack.c.b16 %v334, %v333
    %v394 = vpack.c.b16 %v336, %v335
    %v395 = vpack.c.b16 %v338, %v337
    %v396 = vpack.c.b16 %v340, %v339
    %v397 = vpack.c.b16 %v342, %v341
    %v398 = vpack.c.b16 %v344, %v343
    %v399 = vpack.c.b16 %v346, %v345
    %v400 = vpack.c.b16 %v348, %v347
    %v401 = vpack.c.b16 %v350, %v349
    %v402 = vpack.c.b16 %v352, %v351
    %v403 = vpack.c.b16 %v354, %v353
    %vm453 = vcmask 130048
    %v455 = vsel %vm453, %v53, 0
    %457 = vmatprep.subr.bf16.mxu0 0
    %458 = vmatpush1.bf16.msra.mxu0 %v355
    %459 = vmatprep.subr.bf16.mxu0 0
    %460 = vmatpush1.bf16.msra.mxu0 %v356
    %461 = vmatprep.subr.bf16.mxu0 0
    %462 = vmatpush1.bf16.msra.mxu0 %v357
    %463 = vmatprep.subr.bf16.mxu0 0
    %464 = vmatpush1.bf16.msra.mxu0 %v358
    %465 = vmatprep.subr.bf16.mxu0 0
    %466 = vmatpush1.bf16.msra.mxu0 %v359
    %467 = vmatprep.subr.bf16.mxu0 0
    %468 = vmatpush1.bf16.msra.mxu0 %v360
    %469 = vmatprep.subr.bf16.mxu0 0
    %470 = vmatpush1.bf16.msra.mxu0 %v361
    %471 = vmatprep.subr.bf16.mxu0 0
    %472 = vmatpush1.bf16.msra.mxu0 %v362
    %473 = vmatprep.subr.bf16.mxu0 0
    %474 = vmatpush1.bf16.msra.mxu0 %v363
    %475 = vmatprep.subr.bf16.mxu0 0
    %476 = vmatpush1.bf16.msra.mxu0 %v364
    %477 = vmatprep.subr.bf16.mxu0 0
    %478 = vmatpush1.bf16.msra.mxu0 %v365
    %479 = vmatprep.subr.bf16.mxu0 0
    %480 = vmatpush1.bf16.msra.mxu0 %v366
    %481 = vmatprep.subr.bf16.mxu0 0
    %482 = vmatpush1.bf16.msra.mxu0 %v367
    %483 = vmatprep.subr.bf16.mxu0 0
    %484 = vmatpush1.bf16.msra.mxu0 %v368
    %485 = vmatprep.subr.bf16.mxu0 0
    %486 = vmatpush1.bf16.msra.mxu0 %v369
    %487 = vmatprep.subr.bf16.mxu0 0
    %488 = vmatpush1.bf16.msra.mxu0 %v370
    %489 = vmatprep.mubr.bf16.mxu0 %v48
    %490 = vmatmul.mubr.bf16.gmra.mrb[0].mxu0 %v47
    %v491 = vpop.f32.mrb[0].mxu0
    %v492 = vadd.f32 %v157, %v491
    %v493 = vpop.f32.mrb[0].mxu0
    %v494 = vpop.f32.mrb[0].mxu0
    %v495 = vpop.f32.mrb[0].mxu0
    %496 = vdwg.mxu0
    %497 = vmatprep.subr.bf16.mxu0 0
    %498 = vmatpush1.bf16.msra.mxu0 %v371
    %499 = vmatprep.subr.bf16.mxu0 0
    %500 = vmatpush1.bf16.msra.mxu0 %v372
    %501 = vmatprep.subr.bf16.mxu0 0
    %502 = vmatpush1.bf16.msra.mxu0 %v373
    %503 = vmatprep.subr.bf16.mxu0 0
    %504 = vmatpush1.bf16.msra.mxu0 %v374
    %505 = vmatprep.subr.bf16.mxu0 0
    %506 = vmatpush1.bf16.msra.mxu0 %v375
    %507 = vmatprep.subr.bf16.mxu0 0
    %508 = vmatpush1.bf16.msra.mxu0 %v376
    %509 = vmatprep.subr.bf16.mxu0 0
    %510 = vmatpush1.bf16.msra.mxu0 %v377
    %511 = vmatprep.subr.bf16.mxu0 0
    %512 = vmatpush1.bf16.msra.mxu0 %v378
    %513 = vmatprep.subr.bf16.mxu0 0
    %514 = vmatpush1.bf16.msra.mxu0 %v379
    %515 = vmatprep.subr.bf16.mxu0 0
    %516 = vmatpush1.bf16.msra.mxu0 %v380
    %517 = vmatprep.subr.bf16.mxu0 0
    %518 = vmatpush1.bf16.msra.mxu0 %v381
    %519 = vmatprep.subr.bf16.mxu0 0
    %520 = vmatpush1.bf16.msra.mxu0 %v382
    %521 = vmatprep.subr.bf16.mxu0 0
    %522 = vmatpush1.bf16.msra.mxu0 %v383
    %523 = vmatprep.subr.bf16.mxu0 0
    %524 = vmatpush1.bf16.msra.mxu0 %v384
    %525 = vmatprep.subr.bf16.mxu0 0
    %526 = vmatpush1.bf16.msra.mxu0 %v385
    %527 = vmatprep.subr.bf16.mxu0 0
    %528 = vmatpush1.bf16.msra.mxu0 %v386
    %529 = vmatprep.mubr.bf16.mxu0 %v50
    %530 = vmatmul.mubr.bf16.gmra.mrb[0].mxu0 %v49
    %v531 = vpop.f32.mrb[0].mxu0
    %v532 = vadd.f32 %v492, %v531
    %v533 = vpop.f32.mrb[0].mxu0
    %v534 = vpop.f32.mrb[0].mxu0
    %v535 = vpop.f32.mrb[0].mxu0
    %536 = vdwg.mxu0
    %537 = vmatprep.subr.bf16.mxu0 0
    %538 = vmatpush1.bf16.msra.mxu0 %v387
    %539 = vmatprep.subr.bf16.mxu0 0
    %540 = vmatpush1.bf16.msra.mxu0 %v388
    %541 = vmatprep.subr.bf16.mxu0 0
    %542 = vmatpush1.bf16.msra.mxu0 %v389
    %543 = vmatprep.subr.bf16.mxu0 0
    %544 = vmatpush1.bf16.msra.mxu0 %v390
    %545 = vmatprep.subr.bf16.mxu0 0
    %546 = vmatpush1.bf16.msra.mxu0 %v391
    %547 = vmatprep.subr.bf16.mxu0 0
    %548 = vmatpush1.bf16.msra.mxu0 %v392
    %549 = vmatprep.subr.bf16.mxu0 0
    %550 = vmatpush1.bf16.msra.mxu0 %v393
    %551 = vmatprep.subr.bf16.mxu0 0
    %552 = vmatpush1.bf16.msra.mxu0 %v394
    %553 = vmatprep.subr.bf16.mxu0 0
    %554 = vmatpush1.bf16.msra.mxu0 %v395
    %555 = vmatprep.subr.bf16.mxu0 0
    %556 = vmatpush1.bf16.msra.mxu0 %v396
    %557 = vmatprep.subr.bf16.mxu0 0
    %558 = vmatpush1.bf16.msra.mxu0 %v397
    %559 = vmatprep.subr.bf16.mxu0 0
    %560 = vmatpush1.bf16.msra.mxu0 %v398
    %561 = vmatprep.subr.bf16.mxu0 0
    %562 = vmatpush1.bf16.msra.mxu0 %v399
    %563 = vmatprep.subr.bf16.mxu0 0
    %564 = vmatpush1.bf16.msra.mxu0 %v400
    %565 = vmatprep.subr.bf16.mxu0 0
    %566 = vmatpush1.bf16.msra.mxu0 %v401
    %567 = vmatprep.subr.bf16.mxu0 0
    %568 = vmatpush1.bf16.msra.mxu0 %v402
    %569 = vmatprep.mubr.bf16.mxu0 %v52
    %570 = vmatmul.mubr.bf16.gmra.mrb[0].mxu0 %v51
    %v571 = vpop.f32.mrb[0].mxu0
    %v572 = vadd.f32 %v532, %v571
    %v573 = vpop.f32.mrb[0].mxu0
    %v574 = vpop.f32.mrb[0].mxu0
    %v575 = vpop.f32.mrb[0].mxu0
    %576 = vdwg.mxu0
    %577 = vmatprep.subr.bf16.mxu0 0
    %578 = vmatpush1.bf16.msra.mxu0 %v403
    %579 = vmatprep.subr.bf16.mxu0 0
    %580 = vmatpush1.bf16.msra.mxu0 0
    %581 = vmatprep.subr.bf16.mxu0 0
    %582 = vmatpush1.bf16.msra.mxu0 0
    %583 = vmatprep.subr.bf16.mxu0 0
    %584 = vmatpush1.bf16.msra.mxu0 0
    %585 = vmatprep.subr.bf16.mxu0 0
    %586 = vmatpush1.bf16.msra.mxu0 0
    %587 = vmatprep.subr.bf16.mxu0 0
    %588 = vmatpush1.bf16.msra.mxu0 0
    %589 = vmatprep.subr.bf16.mxu0 0
    %590 = vmatpush1.bf16.msra.mxu0 0
    %591 = vmatprep.subr.bf16.mxu0 0
    %592 = vmatpush1.bf16.msra.mxu0 0
    %593 = vmatprep.subr.bf16.mxu0 0
    %594 = vmatpush1.bf16.msra.mxu0 0
    %595 = vmatprep.subr.bf16.mxu0 0
    %596 = vmatpush1.bf16.msra.mxu0 0
    %597 = vmatprep.subr.bf16.mxu0 0
    %598 = vmatpush1.bf16.msra.mxu0 0
    %599 = vmatprep.subr.bf16.mxu0 0
    %600 = vmatpush1.bf16.msra.mxu0 0
    %601 = vmatprep.subr.bf16.mxu0 0
    %602 = vmatpush1.bf16.msra.mxu0 0
    %603 = vmatprep.subr.bf16.mxu0 0
    %604 = vmatpush1.bf16.msra.mxu0 0
    %605 = vmatprep.subr.bf16.mxu0 0
    %606 = vmatpush1.bf16.msra.mxu0 0
    %607 = vmatprep.subr.bf16.mxu0 0
    %608 = vmatpush1.bf16.msra.mxu0 0
    %609 = vmatprep.mubr.bf16.mxu0 0
    %610 = vmatmul.mubr.bf16.gmra.mrb[0].mxu0 %v455
    %v611 = vpop.f32.mrb[0].mxu0
    %v612 = vadd.f32 %v572, %v611
    %v613 = vpop.f32.mrb[0].mxu0
    %v614 = vpop.f32.mrb[0].mxu0
    %v615 = vpop.f32.mrb[0].mxu0
    %616 = vdwg.mxu0
    %v617 = vld [vmem:[%s3] sm:$0x1]
    %v618 = vld [vmem:[%s4] sm:$0x1]
    %vm619 = vcmask 261120
    %v620 = vsel %vm619, %v612, 0.0
    %621 = vadd.xlane.f32.xlu0 %v620
    %v622 = vpop.xlane.xlu0 %621
    %v623 = vmul.f32 %v612, %v612
    %v624 = vsel %vm619, %v623, 0.0
    %625 = vadd.xlane.f32.xlu0 %v624
    %v626 = vpop.xlane.xlu0 %625
    %v627 = vmul.f32 %v622, 0.03125
    %v628 = vmul.f32 %v626, 0.03125
    %v629 = vmul.f32 %v627, %v627
    %v630 = vsub.f32 %v628, %v629
    %v631 = vmax.f32 %v630, 0.0
    %v632 = vsub.f32 %v612, %v627
    %v633 = vadd.f32 %v631, 1e-05
    %v634 = vrsqrt.pop %v633
    %v635 = vmul.f32 %v632, %v634
    %v637 = vlaneseq
    %v638 = vshrl.u32 %v637, 7
    %v639 = vsub.s32 0, %v638
    %v640 = vrot.slane %v617, %v639
    %v642 = vmul.f32 %v635, %v640
    %v644 = vlaneseq
    %v645 = vshrl.u32 %v644, 7
    %v646 = vsub.s32 0, %v645
    %v647 = vrot.slane %v618, %v646
    %v649 = vadd.f32 %v642, %v647
    %v650 = vmax.f32 %v649, 0.0
    %v651 = vld [vmem:[%s5] sm:$0xff]
    %v652 = vld [vmem:[%s5 + $0x8] sm:$0xff]
    %v653 = vld [vmem:[%s5 + $0x10] sm:$0xff]
    %v654 = vld [vmem:[%s5 + $0x18] sm:$0xff]
    %v655 = vld [vmem:[%s6] sm:$0x1]
    %v657 = vlaneseq
    %v658 = vshrl.u32 %v657, 7
    %v659 = vsub.s32 0, %v658
    %v660 = vrot.slane %v655, %v659
    %v663 = vsel %vm619, %v650, 0
    %665 = vmatprep.subr.mxu0 0.0
    %666 = vmatpush1.msra.mxu0 %v651
    %667 = vmatprep.subr.mxu0 0.0
    %668 = vmatpush1.msra.mxu0 %v652
    %669 = vmatprep.subr.mxu0 0.0
    %670 = vmatpush1.msra.mxu0 %v653
    %671 = vmatprep.subr.mxu0 0.0
    %672 = vmatpush1.msra.mxu0 %v654
    %673 = vmatprep.subr.mxu0 0.0
    %674 = vmatpush1.msra.mxu0 0.0
    %675 = vmatprep.subr.mxu0 0.0
    %676 = vmatpush1.msra.mxu0 0.0
    %677 = vmatprep.subr.mxu0 0.0
    %678 = vmatpush1.msra.mxu0 0.0
    %679 = vmatprep.subr.mxu0 0.0
    %680 = vmatpush1.msra.mxu0 0.0
    %681 = vmatprep.subr.mxu0 0.0
    %682 = vmatpush1.msra.mxu0 0.0
    %683 = vmatprep.subr.mxu0 0.0
    %684 = vmatpush1.msra.mxu0 0.0
    %685 = vmatprep.subr.mxu0 0.0
    %686 = vmatpush1.msra.mxu0 0.0
    %687 = vmatprep.subr.mxu0 0.0
    %688 = vmatpush1.msra.mxu0 0.0
    %689 = vmatprep.subr.mxu0 0.0
    %690 = vmatpush1.msra.mxu0 0.0
    %691 = vmatprep.subr.mxu0 0.0
    %692 = vmatpush1.msra.mxu0 0.0
    %693 = vmatprep.subr.mxu0 0.0
    %694 = vmatpush1.msra.mxu0 0.0
    %695 = vmatprep.subr.mxu0 0.0
    %696 = vmatpush1.msra.mxu0 0.0
    %697 = vmatprep.subr.mxu0 0.0
    %698 = vmatpush1.msra.mxu0 0.0
    %699 = vmatprep.subr.mxu0 0.0
    %700 = vmatpush1.msra.mxu0 0.0
    %701 = vmatprep.subr.mxu0 0.0
    %702 = vmatpush1.msra.mxu0 0.0
    %703 = vmatprep.subr.mxu0 0.0
    %704 = vmatpush1.msra.mxu0 0.0
    %705 = vmatprep.subr.mxu0 0.0
    %706 = vmatpush1.msra.mxu0 0.0
    %707 = vmatprep.subr.mxu0 0.0
    %708 = vmatpush1.msra.mxu0 0.0
    %709 = vmatprep.subr.mxu0 0.0
    %710 = vmatpush1.msra.mxu0 0.0
    %711 = vmatprep.subr.mxu0 0.0
    %712 = vmatpush1.msra.mxu0 0.0
    %713 = vmatprep.subr.mxu0 0.0
    %714 = vmatpush1.msra.mxu0 0.0
    %715 = vmatprep.subr.mxu0 0.0
    %716 = vmatpush1.msra.mxu0 0.0
    %717 = vmatprep.subr.mxu0 0.0
    %718 = vmatpush1.msra.mxu0 0.0
    %719 = vmatprep.subr.mxu0 0.0
    %720 = vmatpush1.msra.mxu0 0.0
    %721 = vmatprep.subr.mxu0 0.0
    %722 = vmatpush1.msra.mxu0 0.0
    %723 = vmatprep.subr.mxu0 0.0
    %724 = vmatpush1.msra.mxu0 0.0
    %725 = vmatprep.subr.mxu0 0.0
    %726 = vmatpush1.msra.mxu0 0.0
    %727 = vmatprep.subr.mxu0 0.0
    %728 = vmatpush1.msra.mxu0 0.0
    %729 = vmatprep.mubr.f32.mxu0 0.0
    %730 = vmatmul.mubr.f32.gmra.mrb[0].mxu0 %v663
    %v731 = vpop.f32.mrb[0].mxu0
    %v732 = vadd.f32 %v660, %v731
    %v733 = vpop.f32.mrb[0].mxu0
    %734 = vdwg.mxu0
    %v735 = vld [vmem:[%s7] sm:$0x1]
    %v736 = vld [vmem:[%s8] sm:$0x1]
    %v737 = vsel %vm619, %v732, 0.0
    %738 = vadd.xlane.f32.xlu0 %v737
    %v739 = vpop.xlane.xlu0 %738
    %v740 = vmul.f32 %v732, %v732
    %v741 = vsel %vm619, %v740, 0.0
    %742 = vadd.xlane.f32.xlu0 %v741
    %v743 = vpop.xlane.xlu0 %742
    %v744 = vmul.f32 %v739, 0.03125
    %v745 = vmul.f32 %v743, 0.03125
    %v746 = vmul.f32 %v744, %v744
    %v747 = vsub.f32 %v745, %v746
    %v748 = vmax.f32 %v747, 0.0
    %v749 = vsub.f32 %v732, %v744
    %v750 = vadd.f32 %v748, 1e-05
    %v751 = vrsqrt.pop %v750
    %v752 = vmul.f32 %v749, %v751
    %v754 = vlaneseq
    %v755 = vshrl.u32 %v754, 7
    %v756 = vsub.s32 0, %v755
    %v757 = vrot.slane %v735, %v756
    %v759 = vmul.f32 %v752, %v757
    %v761 = vlaneseq
    %v762 = vshrl.u32 %v761, 7
    %v763 = vsub.s32 0, %v762
    %v764 = vrot.slane %v736, %v763
    %v766 = vadd.f32 %v759, %v764
    %v767 = vmax.f32 %v766, 0.0
    %s768 = scalar_lea.vmem %s5, 32
    %v769 = vld [vmem:[%s768] sm:$0xff]
    %v770 = vld [vmem:[%s768 + $0x8] sm:$0xff]
    %v771 = vld [vmem:[%s768 + $0x10] sm:$0xff]
    %v772 = vld [vmem:[%s768 + $0x18] sm:$0xff]
    %s773 = scalar_lea.vmem %s6, 1
    %v774 = vld [vmem:[%s773] sm:$0x1]
    %v776 = vlaneseq
    %v777 = vshrl.u32 %v776, 7
    %v778 = vsub.s32 0, %v777
    %v779 = vrot.slane %v774, %v778
    %v782 = vsel %vm619, %v767, 0
    %784 = vmatprep.subr.mxu0 0.0
    %785 = vmatpush1.msra.mxu0 %v769
    %786 = vmatprep.subr.mxu0 0.0
    %787 = vmatpush1.msra.mxu0 %v770
    %788 = vmatprep.subr.mxu0 0.0
    %789 = vmatpush1.msra.mxu0 %v771
    %790 = vmatprep.subr.mxu0 0.0
    %791 = vmatpush1.msra.mxu0 %v772
    %792 = vmatprep.subr.mxu0 0.0
    %793 = vmatpush1.msra.mxu0 0.0
    %794 = vmatprep.subr.mxu0 0.0
    %795 = vmatpush1.msra.mxu0 0.0
    %796 = vmatprep.subr.mxu0 0.0
    %797 = vmatpush1.msra.mxu0 0.0
    %798 = vmatprep.subr.mxu0 0.0
    %799 = vmatpush1.msra.mxu0 0.0
    %800 = vmatprep.subr.mxu0 0.0
    %801 = vmatpush1.msra.mxu0 0.0
    %802 = vmatprep.subr.mxu0 0.0
    %803 = vmatpush1.msra.mxu0 0.0
    %804 = vmatprep.subr.mxu0 0.0
    %805 = vmatpush1.msra.mxu0 0.0
    %806 = vmatprep.subr.mxu0 0.0
    %807 = vmatpush1.msra.mxu0 0.0
    %808 = vmatprep.subr.mxu0 0.0
    %809 = vmatpush1.msra.mxu0 0.0
    %810 = vmatprep.subr.mxu0 0.0
    %811 = vmatpush1.msra.mxu0 0.0
    %812 = vmatprep.subr.mxu0 0.0
    %813 = vmatpush1.msra.mxu0 0.0
    %814 = vmatprep.subr.mxu0 0.0
    %815 = vmatpush1.msra.mxu0 0.0
    %816 = vmatprep.subr.mxu0 0.0
    %817 = vmatpush1.msra.mxu0 0.0
    %818 = vmatprep.subr.mxu0 0.0
    %819 = vmatpush1.msra.mxu0 0.0
    %820 = vmatprep.subr.mxu0 0.0
    %821 = vmatpush1.msra.mxu0 0.0
    %822 = vmatprep.subr.mxu0 0.0
    %823 = vmatpush1.msra.mxu0 0.0
    %824 = vmatprep.subr.mxu0 0.0
    %825 = vmatpush1.msra.mxu0 0.0
    %826 = vmatprep.subr.mxu0 0.0
    %827 = vmatpush1.msra.mxu0 0.0
    %828 = vmatprep.subr.mxu0 0.0
    %829 = vmatpush1.msra.mxu0 0.0
    %830 = vmatprep.subr.mxu0 0.0
    %831 = vmatpush1.msra.mxu0 0.0
    %832 = vmatprep.subr.mxu0 0.0
    %833 = vmatpush1.msra.mxu0 0.0
    %834 = vmatprep.subr.mxu0 0.0
    %835 = vmatpush1.msra.mxu0 0.0
    %836 = vmatprep.subr.mxu0 0.0
    %837 = vmatpush1.msra.mxu0 0.0
    %838 = vmatprep.subr.mxu0 0.0
    %839 = vmatpush1.msra.mxu0 0.0
    %840 = vmatprep.subr.mxu0 0.0
    %841 = vmatpush1.msra.mxu0 0.0
    %842 = vmatprep.subr.mxu0 0.0
    %843 = vmatpush1.msra.mxu0 0.0
    %844 = vmatprep.subr.mxu0 0.0
    %845 = vmatpush1.msra.mxu0 0.0
    %846 = vmatprep.subr.mxu0 0.0
    %847 = vmatpush1.msra.mxu0 0.0
    %848 = vmatprep.mubr.f32.mxu0 0.0
    %849 = vmatmul.mubr.f32.gmra.mrb[0].mxu0 %v782
    %v850 = vpop.f32.mrb[0].mxu0
    %v851 = vadd.f32 %v779, %v850
    %v852 = vpop.f32.mrb[0].mxu0
    %853 = vdwg.mxu0
    %s854 = scalar_lea.vmem %s7, 1
    %v855 = vld [vmem:[%s854] sm:$0x1]
    %s856 = scalar_lea.vmem %s8, 1
    %v857 = vld [vmem:[%s856] sm:$0x1]
    %v858 = vsel %vm619, %v851, 0.0
    %859 = vadd.xlane.f32.xlu0 %v858
    %v860 = vpop.xlane.xlu0 %859
    %v861 = vmul.f32 %v851, %v851
    %v862 = vsel %vm619, %v861, 0.0
    %863 = vadd.xlane.f32.xlu0 %v862
    %v864 = vpop.xlane.xlu0 %863
    %v865 = vmul.f32 %v860, 0.03125
    %v866 = vmul.f32 %v864, 0.03125
    %v867 = vmul.f32 %v865, %v865
    %v868 = vsub.f32 %v866, %v867
    %v869 = vmax.f32 %v868, 0.0
    %v870 = vsub.f32 %v851, %v865
    %v871 = vadd.f32 %v869, 1e-05
    %v872 = vrsqrt.pop %v871
    %v873 = vmul.f32 %v870, %v872
    %v875 = vlaneseq
    %v876 = vshrl.u32 %v875, 7
    %v877 = vsub.s32 0, %v876
    %v878 = vrot.slane %v855, %v877
    %v880 = vmul.f32 %v873, %v878
    %v882 = vlaneseq
    %v883 = vshrl.u32 %v882, 7
    %v884 = vsub.s32 0, %v883
    %v885 = vrot.slane %v857, %v884
    %v887 = vadd.f32 %v880, %v885
    %v888 = vmax.f32 %v887, 0.0
    %v889 = vld [vmem:[%s9] sm:$0xff]
    %v890 = vld [vmem:[%s9 + $0x8] sm:$0xff]
    %v891 = vld [vmem:[%s9 + $0x10] sm:$0xff]
    %v892 = vld [vmem:[%s9 + $0x18] sm:$0xff]
    %v893 = vld [vmem:[%s10] sm:$0x1]
    %v895 = vlaneseq
    %v896 = vshrl.u32 %v895, 7
    %v897 = vsub.s32 0, %v896
    %v898 = vrot.slane %v893, %v897
    %v901 = vsel %vm619, %v888, 0
    %903 = vmatprep.subr.mxu0 0.0
    %904 = vmatpush1.msra.mxu0 %v889
    %905 = vmatprep.subr.mxu0 0.0
    %906 = vmatpush1.msra.mxu0 %v890
    %907 = vmatprep.subr.mxu0 0.0
    %908 = vmatpush1.msra.mxu0 %v891
    %909 = vmatprep.subr.mxu0 0.0
    %910 = vmatpush1.msra.mxu0 %v892
    %911 = vmatprep.subr.mxu0 0.0
    %912 = vmatpush1.msra.mxu0 0.0
    %913 = vmatprep.subr.mxu0 0.0
    %914 = vmatpush1.msra.mxu0 0.0
    %915 = vmatprep.subr.mxu0 0.0
    %916 = vmatpush1.msra.mxu0 0.0
    %917 = vmatprep.subr.mxu0 0.0
    %918 = vmatpush1.msra.mxu0 0.0
    %919 = vmatprep.subr.mxu0 0.0
    %920 = vmatpush1.msra.mxu0 0.0
    %921 = vmatprep.subr.mxu0 0.0
    %922 = vmatpush1.msra.mxu0 0.0
    %923 = vmatprep.subr.mxu0 0.0
    %924 = vmatpush1.msra.mxu0 0.0
    %925 = vmatprep.subr.mxu0 0.0
    %926 = vmatpush1.msra.mxu0 0.0
    %927 = vmatprep.subr.mxu0 0.0
    %928 = vmatpush1.msra.mxu0 0.0
    %929 = vmatprep.subr.mxu0 0.0
    %930 = vmatpush1.msra.mxu0 0.0
    %931 = vmatprep.subr.mxu0 0.0
    %932 = vmatpush1.msra.mxu0 0.0
    %933 = vmatprep.subr.mxu0 0.0
    %934 = vmatpush1.msra.mxu0 0.0
    %935 = vmatprep.subr.mxu0 0.0
    %936 = vmatpush1.msra.mxu0 0.0
    %937 = vmatprep.subr.mxu0 0.0
    %938 = vmatpush1.msra.mxu0 0.0
    %939 = vmatprep.subr.mxu0 0.0
    %940 = vmatpush1.msra.mxu0 0.0
    %941 = vmatprep.subr.mxu0 0.0
    %942 = vmatpush1.msra.mxu0 0.0
    %943 = vmatprep.subr.mxu0 0.0
    %944 = vmatpush1.msra.mxu0 0.0
    %945 = vmatprep.subr.mxu0 0.0
    %946 = vmatpush1.msra.mxu0 0.0
    %947 = vmatprep.subr.mxu0 0.0
    %948 = vmatpush1.msra.mxu0 0.0
    %949 = vmatprep.subr.mxu0 0.0
    %950 = vmatpush1.msra.mxu0 0.0
    %951 = vmatprep.subr.mxu0 0.0
    %952 = vmatpush1.msra.mxu0 0.0
    %953 = vmatprep.subr.mxu0 0.0
    %954 = vmatpush1.msra.mxu0 0.0
    %955 = vmatprep.subr.mxu0 0.0
    %956 = vmatpush1.msra.mxu0 0.0
    %957 = vmatprep.subr.mxu0 0.0
    %958 = vmatpush1.msra.mxu0 0.0
    %959 = vmatprep.subr.mxu0 0.0
    %960 = vmatpush1.msra.mxu0 0.0
    %961 = vmatprep.subr.mxu0 0.0
    %962 = vmatpush1.msra.mxu0 0.0
    %963 = vmatprep.subr.mxu0 0.0
    %964 = vmatpush1.msra.mxu0 0.0
    %965 = vmatprep.subr.mxu0 0.0
    %966 = vmatpush1.msra.mxu0 0.0
    %967 = vmatprep.mubr.f32.mxu0 0.0
    %968 = vmatmul.mubr.f32.gmra.mrb[0].mxu0 %v901
    %v969 = vpop.f32.mrb[0].mxu0
    %v970 = vadd.f32 %v898, %v969
    %v971 = vpop.f32.mrb[0].mxu0
    %972 = vdwg.mxu0
    %v973 = vlaneseq
    %v974 = vand.u32 %v973, 127
    %vm975 = vcmp.lt.s32.totalorder %v974, 10
    %v976 = vsel %vm975, %v970, -inf
    %977 = vmax.xlane.f32.xlu0 %v976
    %v978 = vpop.xlane.xlu0 %977
    %v979 = vsub.f32 %v976, %v978
    %v980 = vmul.f32 %v979, 1.442695
    %v981 = vpow.pop %v980
    %982 = vadd.xlane.f32.xlu0 %v981
    %v983 = vpop.xlane.xlu0 %982
    %v984 = vrcp.pop %v983
    %v985 = vmul.f32 %v981, %v984
    %986 = vst [vmem:[#allocation2] sm:$0xff] %v985
    // Predicated region
    $region46: #{tpu_custom_call.1} parent=1 // pred_check
      _
    $region47: #{tpu_custom_call.1} parent=1 // pred_check_branch
      %988 = sbr.rel (0) target = $region49
    $region48: #{tpu_custom_call.1} parent=1 // pred_region
      %s990 = ssub.s32 128, 128
      %991 = vsyncadd [#allocation3], %s990
      %s993 = sshll.u32 [#allocation2], 4
      %s994 = int_to_ptr.vmem [resolvable:$true] %s993
      %996 = dma.vmem_to_hbm [thread:$0]  %s994, 128, %s11, [#allocation3]
    $region49: #{tpu_custom_call.1} parent=1 // pred_fallthru
      _
    // Predicated region
    $region50: #{tpu_custom_call.1} parent=1 // pred_check
      _
    $region51: #{tpu_custom_call.1} parent=1 // pred_check_branch
      %998 = sbr.rel (0) target = $region53
    $region52: #{tpu_custom_call.1} parent=1 // pred_region
      %999 = dma.done [#allocation3], 128
    $region53: #{tpu_custom_call.1} parent=1 // pred_fallthru
      _
    %1000 = vsyncpa [#allocation3], 1

</llo_original>
